<compile_context>
chip_gen: v7x
topology: tpu7x:2x2x1
jax: 0.10.0
libtpu: 0.0.40
codegen_flags: <defaults>
</compile_context>

<pallas_src>
import jax
import jax.numpy as jnp
from jax.experimental import pallas as pl
from jax.experimental.pallas import tpu as pltpu


def _round_up(a, b):
    return ((a + b - 1) // b) * b


def _cls_head_kernel(w_ref, p_ref, o_ref):
    # (C_out, K_pad) @ (K_pad, tile_m) on the MXU; BN is already folded into W
    # (scale into the weight rows, shift via the bias row of the patches).
    acc = jnp.dot(w_ref[...], p_ref[...], preferred_element_type=jnp.float32)
    o_ref[...] = jnp.maximum(acc, 0.0).astype(o_ref.dtype)


def cls_head_forward(x, weight, gamma, beta, running_mean, running_var,
                     *, stride=2, eps=1e-5, tile_m=512):
    """x: (N, C_in, H, W) f32.  weight: (C_out, C_in, 7, 7).  Returns NCHW."""
    N, C_in, H, W = x.shape
    C_out = weight.shape[0]
    KH = KW = 7
    PAD = 3
    H_out = (H + 2 * PAD - KH) // stride + 1
    W_out = (W + 2 * PAD - KW) // stride + 1

    M = N * H_out * W_out
    K = C_in * KH * KW
    K_pad = _round_up(K + 1, 128)          # +1 row for the folded BN shift

    # ---- tile_m selection: multiple of 128, VMEM-budgeted, M padded to it ---
    tile_m = max(128, _round_up(min(tile_m, _round_up(M, 128)), 128))
    vmem_budget = 24 * 1024 * 1024  # stay well under the 32 MiB scoped default
    while tile_m > 128 and (2 * 4 * tile_m * (K_pad + C_out)
                            + 4 * K_pad * C_out) > vmem_budget:
        tile_m -= 128
    M_pad = _round_up(M, tile_m)
    grid_m = M_pad // tile_m

    # ---- glue: im2col built directly in (K, M) layout -----------------------
    # (N, C_in, H, W) -> (C_in, N, H, W): cheap leading-axis swap on the *small*
    # input (done before the 49x patch inflation).
    x_cn = jnp.transpose(x, (1, 0, 2, 3))
    xp = jnp.pad(x_cn, ((0, 0), (0, 0), (PAD, PAD), (PAD, PAD)))
    taps = []
    for kh in range(KH):
        for kw in range(KW):
            taps.append(
                xp[:, :,
                   kh:kh + stride * (H_out - 1) + 1:stride,
                   kw:kw + stride * (W_out - 1) + 1:stride])
    # (C_in, 49, N, H_out, W_out) -> (K, M); K index = c*49 + kh*7 + kw
    patches = jnp.stack(taps, axis=1).reshape(K, M)
    # Append the all-ones bias row (matches the folded BN shift column of W),
    # then zero-pad K to K_pad and M to M_pad.
    patches = jnp.concatenate([patches, jnp.ones((1, M), patches.dtype)], axis=0)
    patches = jnp.pad(patches, ((0, K_pad - (K + 1)), (0, M_pad - M)))
    # TODO(synk): build the (K, tile_m) patch tile inside the kernel from an
    # NHWC row-tile (halo rows via pl.ANY + make_async_copy) to avoid the
    # HBM-materialized im2col entirely.

    # ---- fold BatchNorm (inference) into the weight matrix -------------------
    scale = gamma / jnp.sqrt(running_var + eps)                    # (C_out,)
    shift = (beta - running_mean * scale).reshape(C_out, 1)        # (C_out, 1)
    w_folded = (weight * scale[:, None, None, None]).reshape(C_out, K)
    w_folded = jnp.concatenate([w_folded, shift], axis=1)          # bias column
    w_folded = jnp.pad(w_folded, ((0, 0), (0, K_pad - (K + 1))))   # (C_out, K_pad)

    # ---- Pallas: fused matmul (+ folded BN) + ReLU ---------------------------
    out_cm = pl.pallas_call(
        _cls_head_kernel,
        out_shape=jax.ShapeDtypeStruct((C_out, M_pad), jnp.float32),
        grid=(grid_m,),
        in_specs=[
            pl.BlockSpec((C_out, K_pad), lambda i: (0, 0)),   # folded weight+shift
            pl.BlockSpec((K_pad, tile_m), lambda i: (0, i)),  # patch tile
        ],
        out_specs=pl.BlockSpec((C_out, tile_m), lambda i: (0, i)),
        compiler_params=pltpu.CompilerParams(
            dimension_semantics=("parallel",)),
    )(w_folded, patches)

    # (C_out, M) -> (C_out, N, H_out, W_out) -> NCHW (leading-axis swap only)
    out = out_cm[:, :M].reshape(C_out, N, H_out, W_out)
    return jnp.transpose(out, (1, 0, 2, 3))


def _reference(x, weight, gamma, beta, running_mean, running_var,
               *, stride=2, eps=1e-5):
    y = jax.lax.conv_general_dilated(
        x, weight, window_strides=(stride, stride),
        padding=((3, 3), (3, 3)),
        dimension_numbers=("NCHW", "OIHW", "NCHW"))
    scale = gamma / jnp.sqrt(running_var + eps)
    shift = beta - running_mean * scale
    y = y * scale[None, :, None, None] + shift[None, :, None, None]
    return jnp.maximum(y, 0.0)


if __name__ == "__main__":
    key = jax.random.PRNGKey(0)
    k_x, k_w, k_g, k_b, k_m, k_v = jax.random.split(key, 6)

    N, C_in, H, W = 2, 4, 16, 16
    C_out, stride = 8, 2

    x = jax.random.normal(k_x, (N, C_in, H, W), dtype=jnp.float32)
    weight = jax.random.normal(k_w, (C_out, C_in, 7, 7), dtype=jnp.float32) * 0.1
    gamma = jax.random.normal(k_g, (C_out,), dtype=jnp.float32) * 0.1 + 1.0
    beta = jax.random.normal(k_b, (C_out,), dtype=jnp.float32) * 0.1
    running_mean = jax.random.normal(k_m, (C_out,), dtype=jnp.float32) * 0.1
    running_var = jax.random.uniform(k_v, (C_out,), dtype=jnp.float32,
                                     minval=0.5, maxval=1.5)

    out = cls_head_forward(x, weight, gamma, beta, running_mean, running_var,
                           stride=stride)
    out = jax.block_until_ready(out)

    ref = _reference(x, weight, gamma, beta, running_mean, running_var,
                     stride=stride)
    assert out.shape == (N, C_out, H // stride, W // stride), out.shape
    assert jnp.max(jnp.abs(out - ref)) < 1e-4, float(jnp.max(jnp.abs(out - ref)))

    print("KERNEL_OK")
</pallas_src>

<mosaic_0001>
module attributes {stable_mosaic.version = 11 : i64} {
  func.func @_cls_head_kernel(%arg0: i32, %arg1: memref<8x256xf32, #tpu.memory_space<vmem>>, %arg2: memref<256x128xf32, #tpu.memory_space<vmem>>, %arg3: memref<8x128xf32, #tpu.memory_space<vmem>>) attributes {dimension_semantics = [#tpu.dimension_semantics<parallel>], iteration_bounds = array<i64: 1>, scalar_prefetch = 0 : i64, scratch_operands = 0 : i64, tpu.core_type = #tpu.core_type<tc>, window_params = [{pipeline_mode = #tpu.pipeline_mode<synchronous>, transform_indices = @transform_0, window_bounds = array<i64: 8, 256>}, {transform_indices = @transform_1, window_bounds = array<i64: 256, 128>}, {transform_indices = @transform_2, window_bounds = array<i64: 8, 128>}]} {
    %c0 = arith.constant 0 : index
    %c0_0 = arith.constant 0 : index
    %0 = vector.load %arg1[%c0, %c0_0] : memref<8x256xf32, #tpu.memory_space<vmem>>, vector<8x256xf32>
    %c0_1 = arith.constant 0 : index
    %c0_2 = arith.constant 0 : index
    %1 = vector.load %arg2[%c0_1, %c0_2] : memref<256x128xf32, #tpu.memory_space<vmem>>, vector<256x128xf32>
    %cst = arith.constant dense<0.000000e+00> : vector<8x128xf32>
    %2 = tpu.matmul %0, %1, %cst {dimension_numbers = #tpu.dot_dimension_numbers<[1], [0], [0], [1], [0, 0, 1, 1], [], []>} : vector<8x256xf32>, vector<256x128xf32>, vector<8x128xf32> -> vector<8x128xf32>
    %cst_3 = arith.constant 0.000000e+00 : f32
    %3 = vector.broadcast %cst_3 : f32 to vector<8x128xf32>
    %4 = arith.maximumf %2, %3 : vector<8x128xf32>
    %c0_4 = arith.constant 0 : index
    %c0_5 = arith.constant 0 : index
    %5 = vector.load %arg3[%c0_4, %c0_5] : memref<8x128xf32, #tpu.memory_space<vmem>>, vector<8x128xf32>
    tpu.vector_store %arg3[%c0_4, %c0_5], %4 {strides = array<i32>} : memref<8x128xf32, #tpu.memory_space<vmem>>, vector<8x128xf32>,
    return
  }
  func.func @transform_0(%arg0: i32) -> (i32, i32) {
    %c0_i32 = arith.constant 0 : i32
    %c0_i32_0 = arith.constant 0 : i32
    %c0_i32_1 = arith.constant 0 : i32
    return %c0_i32, %c0_i32_0 : i32, i32
  }
  func.func @transform_1(%arg0: i32) -> (i32, i32) {
    %c0_i32 = arith.constant 0 : i32
    %c0_i32_0 = arith.constant 0 : i32
    return %c0_i32, %arg0 : i32, i32
  }
  func.func @transform_2(%arg0: i32) -> (i32, i32) {
    %c0_i32 = arith.constant 0 : i32
    %c0_i32_0 = arith.constant 0 : i32
    return %c0_i32, %arg0 : i32, i32
  }
}

</mosaic_0001>

<llo_original>
// kernel: tpu_custom_call.1
$region0: #{tpu_custom_call.1}
  #allocation0 [shape = 'u32[]', space=smem, size = 0x4, offset = 0x4, fixed_abs, tag = 'smem constant byte address 0x4 - core index']
  #allocation1 [shape = 'u32[144,128]{1,0:T(1,128)}', space=vmem, size = 0x12000, scoped, tag = 'internal scratch']
  %s0 = inlined_call_operand.hbm [shape: f32[8,256], index: 0, kind: input, shape index: {}]
  %s1 = inlined_call_operand.hbm [shape: f32[256,128], index: 1, kind: input, shape index: {}]
  %s2 = inlined_call_operand.hbm [shape: f32[8,128], index: 2, kind: output, shape index: {}]
  %s3 = sld [smem:[#allocation0]]
  $region26: #{tpu_custom_call.1} parent=0
    _
  %s5 = ssub.s32 1, %s3
  %s6 = scalar_select 0, %s5, %s3
  $region1: #{tpu_custom_call.1} parent=0
    #allocation2 [shape = 'u8[8192]{0}', space=vmem, size = 0x2000, scoped, tag = 'input window, operand 0, single buffered']
    #allocation3 [shape = 's32[1]{0}', space=sflag, size = 0x4, scoped, tag = 'scoped memory for tpu_custom_call.1']
    #allocation4 [shape = 's32[1]{0}', space=sflag, size = 0x4, scoped, tag = 'scoped memory for tpu_custom_call.1']
    #allocation5 [shape = 'u8[131072]{0}', space=vmem, size = 0x20000, scoped, tag = 'input window, operand 1, single buffered']
    #allocation6 [shape = 's32[1]{0}', space=sflag, size = 0x4, scoped, tag = 'scoped memory for tpu_custom_call.1']
    #allocation7 [shape = 'u8[4096]{0}', space=vmem, size = 0x1000, scoped, tag = 'output window, operand 0, single buffered']
    %7 = vsyncpa [#allocation3], 0
    %8 = vsyncpa [#allocation6], 0
    %9 = vsyncpa [#allocation4], 0
    // Predicated region
    $region2: #{tpu_custom_call.1} parent=1 // pred_check
      _
    $region3: #{tpu_custom_call.1} parent=1 // pred_check_branch
      %11 = sbr.rel (0) target = $region5
    $region4: #{tpu_custom_call.1} parent=1 // pred_region
      %s13 = ssub.s32 256, 256
      %14 = vsyncadd [#allocation3], %s13
      %s16 = sshll.u32 [#allocation2], 4
      %s17 = int_to_ptr.vmem [resolvable:$true] %s16
      %19 = dma.hbm_to_vmem [thread:$0]  %s0, 256, %s17, [#allocation3]
    $region5: #{tpu_custom_call.1} parent=1 // pred_fallthru
      _
    // Predicated region
    $region6: #{tpu_custom_call.1} parent=1 // pred_check
      _
    $region7: #{tpu_custom_call.1} parent=1 // pred_check_branch
      %21 = sbr.rel (0) target = $region9
    $region8: #{tpu_custom_call.1} parent=1 // pred_region
      %s23 = ssub.s32 4096, 4096
      %24 = vsyncadd [#allocation6], %s23
      %s25 = sshll.u32 [#allocation5], 4
      %s26 = int_to_ptr.vmem [resolvable:$true] %s25
      %31 = dma.hbm_to_vmem [thread:$0]  %s1, 4096, %s26, [#allocation6], 128, 128, 8
    $region9: #{tpu_custom_call.1} parent=1 // pred_fallthru
      _
    // Predicated region
    $region10: #{tpu_custom_call.1} parent=1 // pred_check
      _
    $region11: #{tpu_custom_call.1} parent=1 // pred_check_branch
      %33 = sbr.rel (0) target = $region13
    $region12: #{tpu_custom_call.1} parent=1 // pred_region
      %34 = dma.done [#allocation3], 256
    $region13: #{tpu_custom_call.1} parent=1 // pred_fallthru
      _
    // Predicated region
    $region14: #{tpu_custom_call.1} parent=1 // pred_check
      _
    $region15: #{tpu_custom_call.1} parent=1 // pred_check_branch
      %36 = sbr.rel (0) target = $region17
    $region16: #{tpu_custom_call.1} parent=1 // pred_region
      %37 = dma.done [#allocation6], 4096
    $region17: #{tpu_custom_call.1} parent=1 // pred_fallthru
      _
    %v38 = vld [vmem:[#allocation2] sm:$0xff]
    %v39 = vld [vmem:[#allocation2 + $0x8] sm:$0xff]
    %v40 = vld [vmem:[#allocation5] sm:$0xff]
    %v41 = vld [vmem:[#allocation5 + $0x8] sm:$0xff]
    %v42 = vld [vmem:[#allocation5 + $0x10] sm:$0xff]
    %v43 = vld [vmem:[#allocation5 + $0x18] sm:$0xff]
    %v44 = vld [vmem:[#allocation5 + $0x20] sm:$0xff]
    %v45 = vld [vmem:[#allocation5 + $0x28] sm:$0xff]
    %v46 = vld [vmem:[#allocation5 + $0x30] sm:$0xff]
    %v47 = vld [vmem:[#allocation5 + $0x38] sm:$0xff]
    %v48 = vld [vmem:[#allocation5 + $0x40] sm:$0xff]
    %v49 = vld [vmem:[#allocation5 + $0x48] sm:$0xff]
    %v50 = vld [vmem:[#allocation5 + $0x50] sm:$0xff]
    %v51 = vld [vmem:[#allocation5 + $0x58] sm:$0xff]
    %v52 = vld [vmem:[#allocation5 + $0x60] sm:$0xff]
    %v53 = vld [vmem:[#allocation5 + $0x68] sm:$0xff]
    %v54 = vld [vmem:[#allocation5 + $0x70] sm:$0xff]
    %v55 = vld [vmem:[#allocation5 + $0x78] sm:$0xff]
    %v56 = vld [vmem:[#allocation5 + $0x80] sm:$0xff]
    %v57 = vld [vmem:[#allocation5 + $0x88] sm:$0xff]
    %v58 = vld [vmem:[#allocation5 + $0x90] sm:$0xff]
    %v59 = vld [vmem:[#allocation5 + $0x98] sm:$0xff]
    %v60 = vld [vmem:[#allocation5 + $0xa0] sm:$0xff]
    %v61 = vld [vmem:[#allocation5 + $0xa8] sm:$0xff]
    %v62 = vld [vmem:[#allocation5 + $0xb0] sm:$0xff]
    %v63 = vld [vmem:[#allocation5 + $0xb8] sm:$0xff]
    %v64 = vld [vmem:[#allocation5 + $0xc0] sm:$0xff]
    %v65 = vld [vmem:[#allocation5 + $0xc8] sm:$0xff]
    %v66 = vld [vmem:[#allocation5 + $0xd0] sm:$0xff]
    %v67 = vld [vmem:[#allocation5 + $0xd8] sm:$0xff]
    %v68 = vld [vmem:[#allocation5 + $0xe0] sm:$0xff]
    %v69 = vld [vmem:[#allocation5 + $0xe8] sm:$0xff]
    %v70 = vld [vmem:[#allocation5 + $0xf0] sm:$0xff]
    %v71 = vld [vmem:[#allocation5 + $0xf8] sm:$0xff]
    %72 = vmatprep.subr.mxu0 0.0
    %73 = vmatpush1.msra.mxu0 %v40
    %74 = vmatprep.subr.mxu0 0.0
    %75 = vmatpush1.msra.mxu0 %v41
    %76 = vmatprep.subr.mxu0 0.0
    %77 = vmatpush1.msra.mxu0 %v42
    %78 = vmatprep.subr.mxu0 0.0
    %79 = vmatpush1.msra.mxu0 %v43
    %80 = vmatprep.subr.mxu0 0.0
    %81 = vmatpush1.msra.mxu0 %v44
    %82 = vmatprep.subr.mxu0 0.0
    %83 = vmatpush1.msra.mxu0 %v45
    %84 = vmatprep.subr.mxu0 0.0
    %85 = vmatpush1.msra.mxu0 %v46
    %86 = vmatprep.subr.mxu0 0.0
    %87 = vmatpush1.msra.mxu0 %v47
    %88 = vmatprep.subr.mxu0 0.0
    %89 = vmatpush1.msra.mxu0 %v48
    %90 = vmatprep.subr.mxu0 0.0
    %91 = vmatpush1.msra.mxu0 %v49
    %92 = vmatprep.subr.mxu0 0.0
    %93 = vmatpush1.msra.mxu0 %v50
    %94 = vmatprep.subr.mxu0 0.0
    %95 = vmatpush1.msra.mxu0 %v51
    %96 = vmatprep.subr.mxu0 0.0
    %97 = vmatpush1.msra.mxu0 %v52
    %98 = vmatprep.subr.mxu0 0.0
    %99 = vmatpush1.msra.mxu0 %v53
    %100 = vmatprep.subr.mxu0 0.0
    %101 = vmatpush1.msra.mxu0 %v54
    %102 = vmatprep.subr.mxu0 0.0
    %103 = vmatpush1.msra.mxu0 %v55
    %104 = vmatprep.subr.mxu0 0.0
    %105 = vmatpush1.msra.mxu0 %v56
    %106 = vmatprep.subr.mxu0 0.0
    %107 = vmatpush1.msra.mxu0 %v57
    %108 = vmatprep.subr.mxu0 0.0
    %109 = vmatpush1.msra.mxu0 %v58
    %110 = vmatprep.subr.mxu0 0.0
    %111 = vmatpush1.msra.mxu0 %v59
    %112 = vmatprep.subr.mxu0 0.0
    %113 = vmatpush1.msra.mxu0 %v60
    %114 = vmatprep.subr.mxu0 0.0
    %115 = vmatpush1.msra.mxu0 %v61
    %116 = vmatprep.subr.mxu0 0.0
    %117 = vmatpush1.msra.mxu0 %v62
    %118 = vmatprep.subr.mxu0 0.0
    %119 = vmatpush1.msra.mxu0 %v63
    %120 = vmatprep.subr.mxu0 0.0
    %121 = vmatpush1.msra.mxu0 %v64
    %122 = vmatprep.subr.mxu0 0.0
    %123 = vmatpush1.msra.mxu0 %v65
    %124 = vmatprep.subr.mxu0 0.0
    %125 = vmatpush1.msra.mxu0 %v66
    %126 = vmatprep.subr.mxu0 0.0
    %127 = vmatpush1.msra.mxu0 %v67
    %128 = vmatprep.subr.mxu0 0.0
    %129 = vmatpush1.msra.mxu0 %v68
    %130 = vmatprep.subr.mxu0 0.0
    %131 = vmatpush1.msra.mxu0 %v69
    %132 = vmatprep.subr.mxu0 0.0
    %133 = vmatpush1.msra.mxu0 %v70
    %134 = vmatprep.subr.mxu0 0.0
    %135 = vmatpush1.msra.mxu0 %v71
    %136 = vmatprep.mubr.f32.mxu0 %v39
    %137 = vmatmul.mubr.f32.gmra.mrb[0].mxu0 %v38
    %v138 = vpop.f32.mrb[0].mxu0
    %v139 = vadd.f32 0.0, %v138
    %v140 = vpop.f32.mrb[0].mxu0
    %141 = vdwg.mxu0
    %v142 = vmax.f32 %v139, 0.0
    %143 = vst [vmem:[#allocation7] sm:$0xff] %v142
    // Predicated region
    $region18: #{tpu_custom_call.1} parent=1 // pred_check
      _
    $region19: #{tpu_custom_call.1} parent=1 // pred_check_branch
      %145 = sbr.rel (0) target = $region21
    $region20: #{tpu_custom_call.1} parent=1 // pred_region
      %s147 = ssub.s32 128, 128
      %148 = vsyncadd [#allocation4], %s147
      %s150 = sshll.u32 [#allocation7], 4
      %s151 = int_to_ptr.vmem [resolvable:$true] %s150
      %153 = dma.vmem_to_hbm [thread:$0]  %s151, 128, %s2, [#allocation4]
    $region21: #{tpu_custom_call.1} parent=1 // pred_fallthru
      _
    // Predicated region
    $region22: #{tpu_custom_call.1} parent=1 // pred_check
      _
    $region23: #{tpu_custom_call.1} parent=1 // pred_check_branch
      %155 = sbr.rel (0) target = $region25
    $region24: #{tpu_custom_call.1} parent=1 // pred_region
      %156 = dma.done [#allocation4], 128
    $region25: #{tpu_custom_call.1} parent=1 // pred_fallthru
      _
    %157 = vsyncpa [#allocation3], 1
    %158 = vsyncpa [#allocation6], 1
    %159 = vsyncpa [#allocation4], 1

</llo_original>
